<compile_context>
chip_gen: v7x
topology: tpu7x:2x2x1
jax: 0.10.0
libtpu: 0.0.40
codegen_flags: <defaults>
</compile_context>

<pallas_src>
import functools

import jax
import jax.numpy as jnp
from jax.experimental import pallas as pl
from jax.experimental.pallas import tpu as pltpu

BN_EPS = 1e-5
LEAKY_SLOPE = 0.1
LANE = 128
SUBLANE = 8


def _round_up(x, m):
    return (x + m - 1) // m * m


# ---------------------------------------------------------------------------
# Pass 1: tiled conv-as-matmul + per-channel sum / sum-of-squares accumulation
# ---------------------------------------------------------------------------
def _conv_stats_kernel(patch_ref, w_ref, conv_ref, stats_ref):
    # patch_ref : (TM, Kp)  bf16 im2col patch tile
    # w_ref     : (Kp, Cp)  bf16 flattened conv weight (resident across tiles)
    # conv_ref  : (TM, Cp)  f32 raw conv output tile
    # stats_ref : (8,  Cp)  f32 resident accumulator; row0 = sum, row1 = sumsq
    i = pl.program_id(0)

    @pl.when(i == 0)
    def _():
        stats_ref[...] = jnp.zeros_like(stats_ref)

    conv = jnp.dot(patch_ref[...], w_ref[...],
                   preferred_element_type=jnp.float32)            # MXU, f32 acc
    conv_ref[...] = conv

    # Per-channel reductions on the MXU (ones-row matmul) instead of a
    # cross-sublane VPU/XLU reduction; the MXU has plenty of slack at Cp=128.
    ones_row = jnp.ones((1, conv.shape[0]), dtype=jnp.float32)
    s = jnp.dot(ones_row, conv, preferred_element_type=jnp.float32)          # (1, Cp)
    ss = jnp.dot(ones_row, conv * conv, preferred_element_type=jnp.float32)  # (1, Cp)
    stats_ref[0:1, :] = stats_ref[0:1, :] + s
    stats_ref[1:2, :] = stats_ref[1:2, :] + ss


# ---------------------------------------------------------------------------
# Pass 2: BatchNorm (global train-mode batch stats) + LeakyReLU, tiled over M
# ---------------------------------------------------------------------------
def _bn_act_kernel(conv_ref, stats_ref, gamma_ref, beta_ref, o_ref, *, m_total):
    inv_m = 1.0 / m_total
    mean = stats_ref[0:1, :] * inv_m                   # (1, Cp)
    ex2 = stats_ref[1:2, :] * inv_m
    var = jnp.maximum(ex2 - mean * mean, 0.0)          # biased batch variance
    inv_std = jax.lax.rsqrt(var + BN_EPS)              # EUP
    scale = gamma_ref[...] * inv_std                   # (1, Cp), hoisted per tile
    shift = beta_ref[...] - mean * scale
    y = conv_ref[...] * scale + shift                  # broadcast over TM rows (VPU)
    o_ref[...] = jnp.where(y > 0, y, LEAKY_SLOPE * y)  # LeakyReLU(0.1)


# ---------------------------------------------------------------------------
# Host-side im2col + wrapper
# ---------------------------------------------------------------------------
def _im2col(x, kernel_size, stride, pad):
    # x: (N, Cin, H, W) -> patches (N*Ho*Wo, Cin*k*k), K flattened in PyTorch
    # weight order (cin, kh, kw).
    # TODO(synk): fuse im2col into the Pallas kernel (grid over (kh, kw) with
    # element offsets into an NHWC copy of x) to avoid the k*k-times-inflated
    # patch array in HBM.
    n, cin, h, w = x.shape
    k = kernel_size
    h_out = (h + 2 * pad - k) // stride + 1
    w_out = (w + 2 * pad - k) // stride + 1
    x_pad = jnp.pad(x, ((0, 0), (0, 0), (pad, pad), (pad, pad)))
    cols = []
    for kh in range(k):
        for kw in range(k):
            cols.append(
                x_pad[:, :,
                      kh:kh + stride * h_out:stride,
                      kw:kw + stride * w_out:stride])          # (N, Cin, Ho, Wo)
    patches = jnp.stack(cols, axis=2)                          # (N, Cin, k*k, Ho, Wo)
    patches = patches.reshape(n, cin * k * k, h_out, w_out)    # (cin, kh, kw) flat
    patches = patches.transpose(0, 2, 3, 1).reshape(n * h_out * w_out,
                                                    cin * k * k)
    return patches, h_out, w_out


def basic_conv(x, weight, gamma, beta, *, kernel_size, stride=1, block_m=512):
    """x: (N, Cin, H, W); weight: (Cout, Cin, k, k); gamma/beta: (Cout,)."""
    n = x.shape[0]
    cout = weight.shape[0]
    pad = kernel_size // 2

    patches, h_out, w_out = _im2col(x, kernel_size, stride, pad)   # (M, K)
    m_dim, k_dim = patches.shape

    # Padded / tiled sizes: Cout -> lane-dense 128, K -> sublane multiple of 8,
    # M -> multiple of the M tile (zero rows contribute 0 to sum/sumsq).
    cp = _round_up(cout, LANE)
    kp = _round_up(k_dim, SUBLANE)
    tm = _round_up(min(block_m, _round_up(m_dim, SUBLANE)), SUBLANE)
    m_pad = _round_up(m_dim, tm)
    n_tiles = m_pad // tm

    # bf16 MXU operands (accumulation stays f32 inside the kernel).
    patches_p = jnp.zeros((m_pad, kp), jnp.bfloat16)
    patches_p = patches_p.at[:m_dim, :k_dim].set(patches.astype(jnp.bfloat16))
    w_mat = jnp.zeros((kp, cp), jnp.bfloat16)
    w_mat = w_mat.at[:k_dim, :cout].set(
        weight.reshape(cout, -1).T.astype(jnp.bfloat16))
    gamma_p = jnp.zeros((1, cp), jnp.float32).at[0, :cout].set(
        gamma.astype(jnp.float32))
    beta_p = jnp.zeros((1, cp), jnp.float32).at[0, :cout].set(
        beta.astype(jnp.float32))

    # VMEM budget: double-buffered tiles + resident weight/stats, with margin.
    tile_bytes = 2 * (tm * kp * 2 + tm * cp * 4) + kp * cp * 2 + 8 * cp * 4
    vmem_limit = int(min(96 * 1024 * 1024, max(4 * 1024 * 1024, 4 * tile_bytes)))

    # Pass 1: conv tiles + global per-channel sum / sumsq.
    conv_raw, stats = pl.pallas_call(
        _conv_stats_kernel,
        out_shape=(jax.ShapeDtypeStruct((m_pad, cp), jnp.float32),
                   jax.ShapeDtypeStruct((8, cp), jnp.float32)),
        grid=(n_tiles,),
        in_specs=[
            pl.BlockSpec((tm, kp), lambda i: (i, 0)),
            pl.BlockSpec((kp, cp), lambda i: (0, 0)),
        ],
        out_specs=(
            pl.BlockSpec((tm, cp), lambda i: (i, 0)),
            pl.BlockSpec((8, cp), lambda i: (0, 0)),     # resident accumulator
        ),
        compiler_params=pltpu.CompilerParams(
            dimension_semantics=("arbitrary",),  # stats accumulate across M tiles
            vmem_limit_bytes=vmem_limit),
    )(patches_p, w_mat)

    # Pass 2: normalize with the global stats + LeakyReLU.
    out_pad = pl.pallas_call(
        functools.partial(_bn_act_kernel, m_total=float(m_dim)),
        out_shape=jax.ShapeDtypeStruct((m_pad, cp), jnp.float32),
        grid=(n_tiles,),
        in_specs=[
            pl.BlockSpec((tm, cp), lambda i: (i, 0)),
            pl.BlockSpec((8, cp), lambda i: (0, 0)),
            pl.BlockSpec((1, cp), lambda i: (0, 0)),
            pl.BlockSpec((1, cp), lambda i: (0, 0)),
        ],
        out_specs=pl.BlockSpec((tm, cp), lambda i: (i, 0)),
        compiler_params=pltpu.CompilerParams(
            dimension_semantics=("parallel",),   # independent tiles -> megacore
            vmem_limit_bytes=vmem_limit),
    )(conv_raw, stats, gamma_p, beta_p)

    # Drop M/Cout padding, (M, Cout) -> (N, Ho, Wo, Cout) -> NCHW.
    out = out_pad[:m_dim, :cout].reshape(n, h_out, w_out, cout)
    return out.transpose(0, 3, 1, 2)


if __name__ == "__main__":
    # Small deterministic example consistent with BasicConv(4, 8, 3, stride=1).
    key = jax.random.PRNGKey(0)
    k_x, k_w = jax.random.split(key)

    N, C_IN, H, W = 2, 4, 16, 16
    C_OUT, KSIZE, STRIDE = 8, 3, 1

    x = jax.random.normal(k_x, (N, C_IN, H, W), dtype=jnp.float32)

    # Conv2d weight (kaiming-uniform-like deterministic init), no bias.
    fan_in = C_IN * KSIZE * KSIZE
    bound = 1.0 / (fan_in ** 0.5)
    weight = jax.random.uniform(k_w, (C_OUT, C_IN, KSIZE, KSIZE),
                                minval=-bound, maxval=bound, dtype=jnp.float32)
    # BatchNorm2d default init: weight=1, bias=0.
    gamma = jnp.ones((C_OUT,), dtype=jnp.float32)
    beta = jnp.zeros((C_OUT,), dtype=jnp.float32)

    # block_m=128 at this toy size exercises the multi-tile accumulation and
    # pipelined normalization paths (M = 512 -> 4 tiles); default is 512.
    out = basic_conv(x, weight, gamma, beta,
                     kernel_size=KSIZE, stride=STRIDE, block_m=128)
    jax.block_until_ready(out)
    assert out.shape == (N, C_OUT, H, W), out.shape
    assert bool(jnp.all(jnp.isfinite(out)))
    print("KERNEL_OK")
</pallas_src>

<mosaic_0001>
module attributes {stable_mosaic.version = 11 : i64} {
  func.func @_conv_stats_kernel(%arg0: i32, %arg1: memref<128x40xbf16, #tpu.memory_space<vmem>>, %arg2: memref<40x128xbf16, #tpu.memory_space<vmem>>, %arg3: memref<128x128xf32, #tpu.memory_space<vmem>>, %arg4: memref<8x128xf32, #tpu.memory_space<vmem>>) attributes {dimension_semantics = [#tpu.dimension_semantics<arbitrary>], iteration_bounds = array<i64: 4>, scalar_prefetch = 0 : i64, scratch_operands = 0 : i64, tpu.core_type = #tpu.core_type<tc>, window_params = [{transform_indices = @transform_0, window_bounds = array<i64: 128, 40>}, {pipeline_mode = #tpu.pipeline_mode<synchronous>, transform_indices = @transform_1, window_bounds = array<i64: 40, 128>}, {transform_indices = @transform_2, window_bounds = array<i64: 128, 128>}, {pipeline_mode = #tpu.pipeline_mode<synchronous>, transform_indices = @transform_3, window_bounds = array<i64: 8, 128>}]} {
    %c0_i32 = arith.constant 0 : i32
    %0 = arith.cmpi eq, %arg0, %c0_i32 : i32
    %1 = arith.extui %0 : i1 to i32
    %c0_i32_0 = arith.constant 0 : i32
    %2 = arith.cmpi ne, %1, %c0_i32_0 : i32
    scf.if %2 {
      %cst_16 = arith.constant 0.000000e+00 : f32
      %17 = vector.broadcast %cst_16 : f32 to vector<8x128xf32>
      %c0_17 = arith.constant 0 : index
      %c0_18 = arith.constant 0 : index
      %18 = vector.load %arg4[%c0_17, %c0_18] : memref<8x128xf32, #tpu.memory_space<vmem>>, vector<8x128xf32>
      tpu.vector_store %arg4[%c0_17, %c0_18], %17 {strides = array<i32>} : memref<8x128xf32, #tpu.memory_space<vmem>>, vector<8x128xf32>,
    } else {
    }
    %c0 = arith.constant 0 : index
    %c0_1 = arith.constant 0 : index
    %3 = vector.load %arg1[%c0, %c0_1] : memref<128x40xbf16, #tpu.memory_space<vmem>>, vector<128x40xbf16>
    %c0_2 = arith.constant 0 : index
    %c0_3 = arith.constant 0 : index
    %4 = vector.load %arg2[%c0_2, %c0_3] : memref<40x128xbf16, #tpu.memory_space<vmem>>, vector<40x128xbf16>
    %cst = arith.constant dense<0.000000e+00> : vector<128x128xf32>
    %5 = tpu.matmul %3, %4, %cst {dimension_numbers = #tpu.dot_dimension_numbers<[1], [0], [0], [1], [0, 0, 1, 1], [], []>} : vector<128x40xbf16>, vector<40x128xbf16>, vector<128x128xf32> -> vector<128x128xf32>
    %c0_4 = arith.constant 0 : index
    %c0_5 = arith.constant 0 : index
    %6 = vector.load %arg3[%c0_4, %c0_5] : memref<128x128xf32, #tpu.memory_space<vmem>>, vector<128x128xf32>
    tpu.vector_store %arg3[%c0_4, %c0_5], %5 {strides = array<i32>} : memref<128x128xf32, #tpu.memory_space<vmem>>, vector<128x128xf32>,
    %cst_6 = arith.constant 1.000000e+00 : f32
    %7 = vector.broadcast %cst_6 : f32 to vector<1x128xf32>
    %cst_7 = arith.constant dense<0.000000e+00> : vector<1x128xf32>
    %8 = tpu.matmul %7, %5, %cst_7 {dimension_numbers = #tpu.dot_dimension_numbers<[1], [0], [0], [1], [0, 0, 1, 1], [], []>} : vector<1x128xf32>, vector<128x128xf32>, vector<1x128xf32> -> vector<1x128xf32>
    %9 = arith.mulf %5, %5 : vector<128x128xf32>
    %cst_8 = arith.constant dense<0.000000e+00> : vector<1x128xf32>
    %10 = tpu.matmul %7, %9, %cst_8 {dimension_numbers = #tpu.dot_dimension_numbers<[1], [0], [0], [1], [0, 0, 1, 1], [], []>} : vector<1x128xf32>, vector<128x128xf32>, vector<1x128xf32> -> vector<1x128xf32>
    %c0_9 = arith.constant 0 : index
    %c0_10 = arith.constant 0 : index
    %11 = vector.load %arg4[%c0_9, %c0_10] : memref<8x128xf32, #tpu.memory_space<vmem>>, vector<1x128xf32>
    %12 = arith.addf %11, %8 : vector<1x128xf32>
    %c0_11 = arith.constant 0 : index
    %c0_12 = arith.constant 0 : index
    %13 = vector.load %arg4[%c0_11, %c0_12] : memref<8x128xf32, #tpu.memory_space<vmem>>, vector<1x128xf32>
    tpu.vector_store %arg4[%c0_11, %c0_12], %12 {strides = array<i32>} : memref<8x128xf32, #tpu.memory_space<vmem>>, vector<1x128xf32>,
    %c1 = arith.constant 1 : index
    %c0_13 = arith.constant 0 : index
    %14 = vector.load %arg4[%c1, %c0_13] : memref<8x128xf32, #tpu.memory_space<vmem>>, vector<1x128xf32>
    %15 = arith.addf %14, %10 : vector<1x128xf32>
    %c1_14 = arith.constant 1 : index
    %c0_15 = arith.constant 0 : index
    %16 = vector.load %arg4[%c1_14, %c0_15] : memref<8x128xf32, #tpu.memory_space<vmem>>, vector<1x128xf32>
    tpu.vector_store %arg4[%c1_14, %c0_15], %15 {strides = array<i32>} : memref<8x128xf32, #tpu.memory_space<vmem>>, vector<1x128xf32>,
    return
  }
  func.func @transform_0(%arg0: i32) -> (i32, i32) {
    %c0_i32 = arith.constant 0 : i32
    %c0_i32_0 = arith.constant 0 : i32
    return %arg0, %c0_i32 : i32, i32
  }
  func.func @transform_1(%arg0: i32) -> (i32, i32) {
    %c0_i32 = arith.constant 0 : i32
    %c0_i32_0 = arith.constant 0 : i32
    %c0_i32_1 = arith.constant 0 : i32
    return %c0_i32, %c0_i32_0 : i32, i32
  }
  func.func @transform_2(%arg0: i32) -> (i32, i32) {
    %c0_i32 = arith.constant 0 : i32
    %c0_i32_0 = arith.constant 0 : i32
    return %arg0, %c0_i32 : i32, i32
  }
  func.func @transform_3(%arg0: i32) -> (i32, i32) {
    %c0_i32 = arith.constant 0 : i32
    %c0_i32_0 = arith.constant 0 : i32
    %c0_i32_1 = arith.constant 0 : i32
    return %c0_i32, %c0_i32_0 : i32, i32
  }
}

</mosaic_0001>

<llo_original>
// kernel: tpu_custom_call.1
$region0: #{tpu_custom_call.1}
  #allocation0 [shape = 'u32[]', space=smem, size = 0x4, offset = 0x4, fixed_abs, tag = 'smem constant byte address 0x4 - core index']
  #allocation1 [shape = 'u32[144,128]{1,0:T(1,128)}', space=vmem, size = 0x12000, scoped, tag = 'internal scratch']
  %s0 = inlined_call_operand.vmem [shape: bf16[512,40], index: 0, kind: input, shape index: {}]
  %s1 = inlined_call_operand.vmem [shape: bf16[40,128], index: 1, kind: input, shape index: {}]
  %s2 = inlined_call_operand.hbm [shape: f32[512,128], index: 2, kind: output, shape index: {0}]
  %s3 = inlined_call_operand.hbm [shape: f32[8,128], index: 3, kind: output, shape index: {1}]
  %4 = xla_tuple %s2, %s3
  %s5 = sld [smem:[#allocation0]]
  $region53: #{tpu_custom_call.1} parent=0
    _
  %s7 = ssub.s32 1, %s5
  %s8 = scalar_select 0, %s7, %s5
  $region1: #{tpu_custom_call.1} parent=0
    #allocation2 [shape = 'u8[131072]{0}', space=vmem, size = 0x20000, scoped, tag = 'output window, operand 0']
    #allocation3 [shape = 's32[2]{0}', space=sflag, size = 0x8, scoped, tag = 'scoped memory for tpu_custom_call.1']
    #allocation4 [shape = 'u8[4096]{0}', space=vmem, size = 0x1000, scoped, tag = 'output window, operand 1, single buffered']
    #allocation5 [shape = 's32[1]{0}', space=sflag, size = 0x4, scoped, tag = 'scoped memory for tpu_custom_call.1']
    %9 = vsyncpa [#allocation3], 0
    %s10 = scalar_lea.sflag [#allocation3], 1
    %11 = vsyncpa %s10, 0
    %12 = vsyncpa [#allocation5], 0
    loop: start=0, step=1, limit=6
    $region2: #{tpu_custom_call.1} parent=1 // loop_pre_header
      _
    $region3: #{tpu_custom_call.1} parent=1 // loop_header
      %s14 = sphi 0, %s18
      %p15 = scmp.ge.s32.totalorder %s14, 6
      %s24 = sphi 0, %s26
      %s27 = sphi 0, %s24
      %s28 = sphi 0, %s27
      %s44 = sphi 0, %s28
      %s48 = sphi 0, %s48
      %s50 = sphi 0, %s48
      %s51 = sphi 0, %s50
      %s65 = sphi 0, %s51
      %s71 = sphi 0, %s73
      %s74 = sphi 0, %s71
      %s75 = sphi 0, %s74
      %s91 = sphi 0, %s75
      %s95 = sphi 0, %s95
      %s97 = sphi 0, %s95
      %s98 = sphi 0, %s97
      %s112 = sphi 0, %s98
    $region4: #{tpu_custom_call.1} parent=1 // loop_header_branch
      %17 = sbr.rel (%p15) target = $region8
    $region5: #{tpu_custom_call.1} parent=1 // loop_body
      %s19 = ssub.s32 %s14, 1
      %s20 = ssub.s32 %s14, 2
      %s21 = sadd.s32 %s14, 1
      %s22 = ssub.s32 %s14, %s21
      %p23 = scmp.eq.s32.totalorder %s22, 0
      %s25 = sadd.s32 %s24, 1
      %s26 = scalar_select %p23, %s24, %s25
      %p29 = pneg %p23
      %p30 = scmp.eq.s32.totalorder %s14, 3
      %p31 = por %p29, %p30
      %p32 = scmp.ne.s32.totalorder %s24, %s27
      %p33 = scmp.eq.s32.totalorder %s14, 0
      %p34 = por %p32, %p33
      %p35 = scmp.ne.s32.totalorder %s24, %s27
      %p36 = scmp.eq.s32.totalorder %s19, 3
      %p37 = por %p35, %p36
      %p38 = scmp.ne.s32.totalorder %s27, %s28
      %p39 = scmp.eq.s32.totalorder %s19, 0
      %p40 = por %p38, %p39
      %p41 = scmp.ne.s32.totalorder %s27, %s28
      %p42 = scmp.eq.s32.totalorder %s20, 3
      %p43 = por %p41, %p42
      %p45 = scmp.ne.s32.totalorder %s28, %s44
      %p46 = scmp.eq.s32.totalorder %s20, 0
      %p47 = por %p45, %p46
      %s49 = sadd.s32 %s48, 1
      %p52 = scmp.eq.s32.totalorder %s14, 3
      %p53 = scmp.ne.s32.totalorder %s48, %s50
      %p54 = scmp.eq.s32.totalorder %s14, 0
      %p55 = por %p53, %p54
      %p56 = scmp.ne.s32.totalorder %s48, %s50
      %p57 = scmp.eq.s32.totalorder %s19, 3
      %p58 = por %p56, %p57
      %p59 = scmp.ne.s32.totalorder %s50, %s51
      %p60 = scmp.eq.s32.totalorder %s19, 0
      %p61 = por %p59, %p60
      %p62 = scmp.ne.s32.totalorder %s50, %s51
      %p63 = scmp.eq.s32.totalorder %s20, 3
      %p64 = por %p62, %p63
      %p66 = scmp.ne.s32.totalorder %s51, %s65
      %p67 = scmp.eq.s32.totalorder %s20, 0
      %p68 = por %p66, %p67
      %s69 = ssub.s32 %s14, %s21
      %p70 = scmp.eq.s32.totalorder %s69, 0
      %s72 = sadd.s32 %s71, 1
      %s73 = scalar_select %p70, %s71, %s72
      %p76 = pneg %p70
      %p77 = scmp.eq.s32.totalorder %s14, 3
      %p78 = por %p76, %p77
      %p79 = scmp.ne.s32.totalorder %s71, %s74
      %p80 = scmp.eq.s32.totalorder %s14, 0
      %p81 = por %p79, %p80
      %p82 = scmp.ne.s32.totalorder %s71, %s74
      %p83 = scmp.eq.s32.totalorder %s19, 3
      %p84 = por %p82, %p83
      %p85 = scmp.ne.s32.totalorder %s74, %s75
      %p86 = scmp.eq.s32.totalorder %s19, 0
      %p87 = por %p85, %p86
      %p88 = scmp.ne.s32.totalorder %s74, %s75
      %p89 = scmp.eq.s32.totalorder %s20, 3
      %p90 = por %p88, %p89
      %p92 = scmp.ne.s32.totalorder %s75, %s91
      %p93 = scmp.eq.s32.totalorder %s20, 0
      %p94 = por %p92, %p93
      %s96 = sadd.s32 %s95, 1
      %p99 = scmp.eq.s32.totalorder %s14, 3
      %p100 = scmp.ne.s32.totalorder %s95, %s97
      %p101 = scmp.eq.s32.totalorder %s14, 0
      %p102 = por %p100, %p101
      %p103 = scmp.ne.s32.totalorder %s95, %s97
      %p104 = scmp.eq.s32.totalorder %s19, 3
      %p105 = por %p103, %p104
      %p106 = scmp.ne.s32.totalorder %s97, %s98
      %p107 = scmp.eq.s32.totalorder %s19, 0
      %p108 = por %p106, %p107
      %p109 = scmp.ne.s32.totalorder %s97, %s98
      %p110 = scmp.eq.s32.totalorder %s20, 3
      %p111 = por %p109, %p110
      %p113 = scmp.ne.s32.totalorder %s98, %s112
      %p114 = scmp.eq.s32.totalorder %s20, 0
      %p115 = por %p113, %p114
      %p116 = scmp.le.s32.totalorder 1, %s14
      %p117 = scmp.lt.s32.totalorder %s14, 5
      %p118 = pnand %p116, %p117
      %p119 = pneg %p118
      // Predicated region
      $region9: #{tpu_custom_call.1} parent=5 // pred_check
        _
      $region10: #{tpu_custom_call.1} parent=5 // pred_check_branch
        %121 = sbr.rel (%p118) target = $region12
      $region11: #{tpu_custom_call.1} parent=5 // pred_region
        %s122 = ssub.s32 %s14, 1
        // Predicated region
        $region13: #{tpu_custom_call.1} parent=11 // pred_check
          %p123 = pneg %p61
        $region14: #{tpu_custom_call.1} parent=11 // pred_check_branch
          %125 = sbr.rel (%p123) target = $region16
        $region15: #{tpu_custom_call.1} parent=11 // pred_region
          _
        $region16: #{tpu_custom_call.1} parent=11 // pred_fallthru
          _
      $region12: #{tpu_custom_call.1} parent=5 // pred_fallthru
        _
      %p126 = scmp.lt.s32.totalorder %s14, 4
      // Predicated region
      $region17: #{tpu_custom_call.1} parent=5 // pred_check
        %p127 = pneg %p126
      $region18: #{tpu_custom_call.1} parent=5 // pred_check_branch
        %129 = sbr.rel (%p127) target = $region20
      $region19: #{tpu_custom_call.1} parent=5 // pred_region
        // Predicated region
        $region21: #{tpu_custom_call.1} parent=19 // pred_check
          %p130 = pneg %p34
        $region22: #{tpu_custom_call.1} parent=19 // pred_check_branch
          %132 = sbr.rel (%p130) target = $region24
        $region23: #{tpu_custom_call.1} parent=19 // pred_region
          %s133 = smul.u32 16, %s14
          %p134 = scmp.lt.s32.totalorder %s133, 63
          %s135 = scalar_select %p134, %s133, 63
          %s136 = smul.addr %s135, 4
          %s137 = scalar_lea.vmem %s0, %s136
          %s138 = smul.u32 16, %s14
        $region24: #{tpu_custom_call.1} parent=19 // pred_fallthru
          _
      $region20: #{tpu_custom_call.1} parent=5 // pred_fallthru
        _
      %p139 = scmp.le.s32.totalorder 1, %s14
      %p140 = scmp.lt.s32.totalorder %s14, 5
      %p141 = pnand %p139, %p140
      %p142 = pneg %p141
      // Predicated region
      $region25: #{tpu_custom_call.1} parent=5 // pred_check
        _
      $region26: #{tpu_custom_call.1} parent=5 // pred_check_branch
        %144 = sbr.rel (%p141) target = $region28
      $region27: #{tpu_custom_call.1} parent=5 // pred_region
        %s145 = ssub.s32 %s14, 1
        %s146 = smul.u32 16, %s19
        %p147 = scmp.lt.s32.totalorder %s146, 63
        %s148 = scalar_select %p147, %s146, 63
        %s149 = smul.addr %s148, 4
        %s150 = scalar_lea.vmem %s0, %s149
        %p151 = pneg %p40
        %p152 = pneg %p37
        %p153 = pneg %p61
        %p154 = pneg %p58
        %p155 = pneg %p87
        %p156 = pneg %p84
        %s157 = sand.u32 %s74, 1
        %s158 = scalar_lea.sflag [#allocation3], %s157
        %s159 = sand.u32 %s74, 1
        %s160 = smul.addr %s159, 128
        %s161 = scalar_lea.vmem [#allocation2], %s160
        %p162 = pneg %p108
        %p163 = pneg %p105
        %s164 = smul.u32 16, %s19
        %p165 = scmp.lt.s32.totalorder %s164, 63
        %s166 = scalar_select %p165, %s164, 63
        %s167 = smul.addr %s166, 4
        %s168 = scalar_lea.vmem %s0, %s167
        %s169 = smul.u32 16, %s19
        %s170 = smul.u32 16, %s19
        %p172 = scmp.eq.s32.totalorder %s19, 0
        // Predicated region
        $region29: #{tpu_custom_call.1} parent=27 // pred_check
          %p173 = pneg %p172
        $region30: #{tpu_custom_call.1} parent=27 // pred_check_branch
          %175 = sbr.rel (%p173) target = $region32
        $region31: #{tpu_custom_call.1} parent=27 // pred_region
          %176 = vst [vmem:[#allocation4] sm:$0xff] 0.0
        $region32: #{tpu_custom_call.1} parent=27 // pred_fallthru
          _
        %v177 = vld [vmem:[%s168] sm:$0xf]
        %v178 = vld [vmem:[%s168 + $0x4] sm:$0xf]
        %v179 = vld [vmem:[%s168 + $0x8] sm:$0xf]
        %v180 = vld [vmem:[%s168 + $0xc] sm:$0xf]
        %v181 = vld [vmem:[%s168 + $0x10] sm:$0xf]
        %v182 = vld [vmem:[%s168 + $0x14] sm:$0xf]
        %v183 = vld [vmem:[%s168 + $0x18] sm:$0xf]
        %v184 = vld [vmem:[%s168 + $0x1c] sm:$0xf]
        %v185 = vld [vmem:[%s168 + $0x20] sm:$0xf]
        %v186 = vld [vmem:[%s168 + $0x24] sm:$0xf]
        %v187 = vld [vmem:[%s168 + $0x28] sm:$0xf]
        %v188 = vld [vmem:[%s168 + $0x2c] sm:$0xf]
        %v189 = vld [vmem:[%s168 + $0x30] sm:$0xf]
        %v190 = vld [vmem:[%s168 + $0x34] sm:$0xf]
        %v191 = vld [vmem:[%s168 + $0x38] sm:$0xf]
        %v192 = vld [vmem:[%s168 + $0x3c] sm:$0xf]
        %v193 = vld [vmem:[%s1] sm:$0xf]
        %v194 = vld [vmem:[%s1 + $0x4] sm:$0xf]
        %v195 = vld [vmem:[%s1 + $0x8] sm:$0xf]
        %v196 = vld [vmem:[%s1 + $0xc] sm:$0xf]
        %v197 = vld [vmem:[%s1 + $0x10] sm:$0xf]
        %v214 = vunpack.c.l.b16 %v177
        %v215 = vunpack.c.l.b16 %v178
        %v216 = vunpack.c.l.b16 %v179
        %v217 = vunpack.c.l.b16 %v180
        %v218 = vunpack.c.l.b16 %v181
        %v219 = vunpack.c.l.b16 %v182
        %v220 = vunpack.c.l.b16 %v183
        %v221 = vunpack.c.l.b16 %v184
        %v222 = vunpack.c.l.b16 %v185
        %v223 = vunpack.c.l.b16 %v186
        %v224 = vunpack.c.l.b16 %v187
        %v225 = vunpack.c.l.b16 %v188
        %v226 = vunpack.c.l.b16 %v189
        %v227 = vunpack.c.l.b16 %v190
        %v228 = vunpack.c.l.b16 %v191
        %v229 = vunpack.c.l.b16 %v192
        %v230 = vpack.c.b16 %v215, %v214
        %v231 = vpack.c.b16 %v217, %v216
        %v232 = vpack.c.b16 %v219, %v218
        %v233 = vpack.c.b16 %v221, %v220
        %v234 = vpack.c.b16 %v223, %v222
        %v235 = vpack.c.b16 %v225, %v224
        %v236 = vpack.c.b16 %v227, %v226
        %v237 = vpack.c.b16 %v229, %v228
        %v243 = vunpack.c.l.b16 %v193
        %v244 = vunpack.c.l.b16 %v194
        %v245 = vunpack.c.l.b16 %v195
        %v246 = vunpack.c.l.b16 %v196
        %v247 = vunpack.c.l.b16 %v197
        %v248 = vpack.c.b16 %v244, %v243
        %v249 = vpack.c.b16 %v246, %v245
        %v250 = vpack.c.b16 %v247, %v247
        %vm253 = vcmask 326656
        %v255 = vsel %vm253, %v230, 0
        %v258 = vsel %vm253, %v231, 0
        %v261 = vsel %vm253, %v232, 0
        %v264 = vsel %vm253, %v233, 0
        %v267 = vsel %vm253, %v234, 0
        %v270 = vsel %vm253, %v235, 0
        %v273 = vsel %vm253, %v236, 0
        %v276 = vsel %vm253, %v237, 0
        %vm278 = vcmask 1043456
        %v280 = vsel %vm278, %v250, 0
        %282 = vmatprep.subr.bf16.mxu0 0
        %283 = vmatpush1.bf16.msra.mxu0 %v248
        %284 = vmatprep.subr.bf16.mxu0 0
        %285 = vmatpush1.bf16.msra.mxu0 %v249
        %286 = vmatprep.subr.bf16.mxu0 0
        %287 = vmatpush1.bf16.msra.mxu0 %v280
        %288 = vmatprep.subr.bf16.mxu0 0
        %289 = vmatpush1.bf16.msra.mxu0 0
        %290 = vmatprep.subr.bf16.mxu0 0
        %291 = vmatpush1.bf16.msra.mxu0 0
        %292 = vmatprep.subr.bf16.mxu0 0
        %293 = vmatpush1.bf16.msra.mxu0 0
        %294 = vmatprep.subr.bf16.mxu0 0
        %295 = vmatpush1.bf16.msra.mxu0 0
        %296 = vmatprep.subr.bf16.mxu0 0
        %297 = vmatpush1.bf16.msra.mxu0 0
        %298 = vmatprep.subr.bf16.mxu0 0
        %299 = vmatpush1.bf16.msra.mxu0 0
        %300 = vmatprep.subr.bf16.mxu0 0
        %301 = vmatpush1.bf16.msra.mxu0 0
        %302 = vmatprep.subr.bf16.mxu0 0
        %303 = vmatpush1.bf16.msra.mxu0 0
        %304 = vmatprep.subr.bf16.mxu0 0
        %305 = vmatpush1.bf16.msra.mxu0 0
        %306 = vmatprep.subr.bf16.mxu0 0
        %307 = vmatpush1.bf16.msra.mxu0 0
        %308 = vmatprep.subr.bf16.mxu0 0
        %309 = vmatpush1.bf16.msra.mxu0 0
        %310 = vmatprep.subr.bf16.mxu0 0
        %311 = vmatpush1.bf16.msra.mxu0 0
        %312 = vmatprep.subr.bf16.mxu0 0
        %313 = vmatpush1.bf16.msra.mxu0 0
        %314 = vmatprep.mubr.bf16.mxu0 0
        %315 = vmatmul.mubr.bf16.gmra.mrb[0].mxu0 %v255
        %v316 = vpop.f32.mrb[0].mxu0
        %v317 = vadd.f32 0.0, %v316
        %v318 = vpop.f32.mrb[0].mxu0
        %v319 = vpop.f32.mrb[0].mxu0
        %v320 = vadd.f32 0.0, %v319
        %v321 = vpop.f32.mrb[0].mxu0
        %322 = vmatprep.mubr.bf16.mxu0 0
        %323 = vmatmul.mubr.bf16.gmra.mrb[0].mxu0 %v258
        %v324 = vpop.f32.mrb[0].mxu0
        %v325 = vadd.f32 0.0, %v324
        %v326 = vpop.f32.mrb[0].mxu0
        %v327 = vpop.f32.mrb[0].mxu0
        %v328 = vadd.f32 0.0, %v327
        %v329 = vpop.f32.mrb[0].mxu0
        %330 = vmatprep.mubr.bf16.mxu0 0
        %331 = vmatmul.mubr.bf16.gmra.mrb[0].mxu0 %v261
        %v332 = vpop.f32.mrb[0].mxu0
        %v333 = vadd.f32 0.0, %v332
        %v334 = vpop.f32.mrb[0].mxu0
        %v335 = vpop.f32.mrb[0].mxu0
        %v336 = vadd.f32 0.0, %v335
        %v337 = vpop.f32.mrb[0].mxu0
        %338 = vmatprep.mubr.bf16.mxu0 0
        %339 = vmatmul.mubr.bf16.gmra.mrb[0].mxu0 %v264
        %v340 = vpop.f32.mrb[0].mxu0
        %v341 = vadd.f32 0.0, %v340
        %v342 = vpop.f32.mrb[0].mxu0
        %v343 = vpop.f32.mrb[0].mxu0
        %v344 = vadd.f32 0.0, %v343
        %v345 = vpop.f32.mrb[0].mxu0
        %346 = vmatprep.mubr.bf16.mxu0 0
        %347 = vmatmul.mubr.bf16.gmra.mrb[0].mxu0 %v267
        %v348 = vpop.f32.mrb[0].mxu0
        %v349 = vadd.f32 0.0, %v348
        %v350 = vpop.f32.mrb[0].mxu0
        %v351 = vpop.f32.mrb[0].mxu0
        %v352 = vadd.f32 0.0, %v351
        %v353 = vpop.f32.mrb[0].mxu0
        %354 = vmatprep.mubr.bf16.mxu0 0
        %355 = vmatmul.mubr.bf16.gmra.mrb[0].mxu0 %v270
        %v356 = vpop.f32.mrb[0].mxu0
        %v357 = vadd.f32 0.0, %v356
        %v358 = vpop.f32.mrb[0].mxu0
        %v359 = vpop.f32.mrb[0].mxu0
        %v360 = vadd.f32 0.0, %v359
        %v361 = vpop.f32.mrb[0].mxu0
        %362 = vmatprep.mubr.bf16.mxu0 0
        %363 = vmatmul.mubr.bf16.gmra.mrb[0].mxu0 %v273
        %v364 = vpop.f32.mrb[0].mxu0
        %v365 = vadd.f32 0.0, %v364
        %v366 = vpop.f32.mrb[0].mxu0
        %v367 = vpop.f32.mrb[0].mxu0
        %v368 = vadd.f32 0.0, %v367
        %v369 = vpop.f32.mrb[0].mxu0
        %370 = vmatprep.mubr.bf16.mxu0 0
        %371 = vmatmul.mubr.bf16.gmra.mrb[0].mxu0 %v276
        %v372 = vpop.f32.mrb[0].mxu0
        %v373 = vadd.f32 0.0, %v372
        %v374 = vpop.f32.mrb[0].mxu0
        %v375 = vpop.f32.mrb[0].mxu0
        %v376 = vadd.f32 0.0, %v375
        %v377 = vpop.f32.mrb[0].mxu0
        %378 = vdwg.mxu0
        %379 = vst [vmem:[%s161] sm:$0xff] %v317
        %380 = vst [vmem:[%s161 + $0x8] sm:$0xff] %v320
        %381 = vst [vmem:[%s161 + $0x10] sm:$0xff] %v325
        %382 = vst [vmem:[%s161 + $0x18] sm:$0xff] %v328
        %383 = vst [vmem:[%s161 + $0x20] sm:$0xff] %v333
        %384 = vst [vmem:[%s161 + $0x28] sm:$0xff] %v336
        %385 = vst [vmem:[%s161 + $0x30] sm:$0xff] %v341
        %386 = vst [vmem:[%s161 + $0x38] sm:$0xff] %v344
        %387 = vst [vmem:[%s161 + $0x40] sm:$0xff] %v349
        %388 = vst [vmem:[%s161 + $0x48] sm:$0xff] %v352
        %389 = vst [vmem:[%s161 + $0x50] sm:$0xff] %v357
        %390 = vst [vmem:[%s161 + $0x58] sm:$0xff] %v360
        %391 = vst [vmem:[%s161 + $0x60] sm:$0xff] %v365
        %392 = vst [vmem:[%s161 + $0x68] sm:$0xff] %v368
        %393 = vst [vmem:[%s161 + $0x70] sm:$0xff] %v373
        %394 = vst [vmem:[%s161 + $0x78] sm:$0xff] %v376
        %395 = vmatprep.subr.mxu0 0.0
        %396 = vmatpush1.msra.mxu0 %v317
        %397 = vmatprep.subr.mxu0 0.0
        %398 = vmatpush1.msra.mxu0 %v320
        %399 = vmatprep.subr.mxu0 0.0
        %400 = vmatpush1.msra.mxu0 %v325
        %401 = vmatprep.subr.mxu0 0.0
        %402 = vmatpush1.msra.mxu0 %v328
        %403 = vmatprep.subr.mxu0 0.0
        %404 = vmatpush1.msra.mxu0 %v333
        %405 = vmatprep.subr.mxu0 0.0
        %406 = vmatpush1.msra.mxu0 %v336
        %407 = vmatprep.subr.mxu0 0.0
        %408 = vmatpush1.msra.mxu0 %v341
        %409 = vmatprep.subr.mxu0 0.0
        %410 = vmatpush1.msra.mxu0 %v344
        %411 = vmatprep.subr.mxu0 0.0
        %412 = vmatpush1.msra.mxu0 %v349
        %413 = vmatprep.subr.mxu0 0.0
        %414 = vmatpush1.msra.mxu0 %v352
        %415 = vmatprep.subr.mxu0 0.0
        %416 = vmatpush1.msra.mxu0 %v357
        %417 = vmatprep.subr.mxu0 0.0
        %418 = vmatpush1.msra.mxu0 %v360
        %419 = vmatprep.subr.mxu0 0.0
        %420 = vmatpush1.msra.mxu0 %v365
        %421 = vmatprep.subr.mxu0 0.0
        %422 = vmatpush1.msra.mxu0 %v368
        %423 = vmatprep.subr.mxu0 0.0
        %424 = vmatpush1.msra.mxu0 %v373
        %425 = vmatprep.subr.mxu0 0.0
        %426 = vmatpush1.msra.mxu0 %v376
        %427 = vmatprep.subr.mxu0 0.0
        %428 = vmatpush1.msra.mxu0 0.0
        %429 = vmatprep.subr.mxu0 0.0
        %430 = vmatpush1.msra.mxu0 0.0
        %431 = vmatprep.subr.mxu0 0.0
        %432 = vmatpush1.msra.mxu0 0.0
        %433 = vmatprep.subr.mxu0 0.0
        %434 = vmatpush1.msra.mxu0 0.0
        %435 = vmatprep.subr.mxu0 0.0
        %436 = vmatpush1.msra.mxu0 0.0
        %437 = vmatprep.subr.mxu0 0.0
        %438 = vmatpush1.msra.mxu0 0.0
        %439 = vmatprep.subr.mxu0 0.0
        %440 = vmatpush1.msra.mxu0 0.0
        %441 = vmatprep.subr.mxu0 0.0
        %442 = vmatpush1.msra.mxu0 0.0
        %443 = vmatprep.subr.mxu0 0.0
        %444 = vmatpush1.msra.mxu0 0.0
        %445 = vmatprep.subr.mxu0 0.0
        %446 = vmatpush1.msra.mxu0 0.0
        %447 = vmatprep.subr.mxu0 0.0
        %448 = vmatpush1.msra.mxu0 0.0
        %449 = vmatprep.subr.mxu0 0.0
        %450 = vmatpush1.msra.mxu0 0.0
        %451 = vmatprep.subr.mxu0 0.0
        %452 = vmatpush1.msra.mxu0 0.0
        %453 = vmatprep.subr.mxu0 0.0
        %454 = vmatpush1.msra.mxu0 0.0
        %455 = vmatprep.subr.mxu0 0.0
        %456 = vmatpush1.msra.mxu0 0.0
        %457 = vmatprep.subr.mxu0 0.0
        %458 = vmatpush1.msra.mxu0 0.0
        %459 = vmatprep.mubr.f32.mxu0 0.0
        %460 = vmatmul.mubr.f32.gmra.mrb[0].mxu0 1.0
        %v461 = vpop.f32.mrb[0].mxu0
        %v462 = vadd.f32 0.0, %v461
        %v463 = vpop.f32.mrb[0].mxu0
        %464 = vdwg.mxu0
        %v465 = vmul.f32 %v317, %v317
        %v466 = vmul.f32 %v320, %v320
        %v467 = vmul.f32 %v325, %v325
        %v468 = vmul.f32 %v328, %v328
        %v469 = vmul.f32 %v333, %v333
        %v470 = vmul.f32 %v336, %v336
        %v471 = vmul.f32 %v341, %v341
        %v472 = vmul.f32 %v344, %v344
        %v473 = vmul.f32 %v349, %v349
        %v474 = vmul.f32 %v352, %v352
        %v475 = vmul.f32 %v357, %v357
        %v476 = vmul.f32 %v360, %v360
        %v477 = vmul.f32 %v365, %v365
        %v478 = vmul.f32 %v368, %v368
        %v479 = vmul.f32 %v373, %v373
        %v480 = vmul.f32 %v376, %v376
        %481 = vmatprep.subr.mxu0 0.0
        %482 = vmatpush1.msra.mxu0 %v465
        %483 = vmatprep.subr.mxu0 0.0
        %484 = vmatpush1.msra.mxu0 %v466
        %485 = vmatprep.subr.mxu0 0.0
        %486 = vmatpush1.msra.mxu0 %v467
        %487 = vmatprep.subr.mxu0 0.0
        %488 = vmatpush1.msra.mxu0 %v468
        %489 = vmatprep.subr.mxu0 0.0
        %490 = vmatpush1.msra.mxu0 %v469
        %491 = vmatprep.subr.mxu0 0.0
        %492 = vmatpush1.msra.mxu0 %v470
        %493 = vmatprep.subr.mxu0 0.0
        %494 = vmatpush1.msra.mxu0 %v471
        %495 = vmatprep.subr.mxu0 0.0
        %496 = vmatpush1.msra.mxu0 %v472
        %497 = vmatprep.subr.mxu0 0.0
        %498 = vmatpush1.msra.mxu0 %v473
        %499 = vmatprep.subr.mxu0 0.0
        %500 = vmatpush1.msra.mxu0 %v474
        %501 = vmatprep.subr.mxu0 0.0
        %502 = vmatpush1.msra.mxu0 %v475
        %503 = vmatprep.subr.mxu0 0.0
        %504 = vmatpush1.msra.mxu0 %v476
        %505 = vmatprep.subr.mxu0 0.0
        %506 = vmatpush1.msra.mxu0 %v477
        %507 = vmatprep.subr.mxu0 0.0
        %508 = vmatpush1.msra.mxu0 %v478
        %509 = vmatprep.subr.mxu0 0.0
        %510 = vmatpush1.msra.mxu0 %v479
        %511 = vmatprep.subr.mxu0 0.0
        %512 = vmatpush1.msra.mxu0 %v480
        %513 = vmatprep.subr.mxu0 0.0
        %514 = vmatpush1.msra.mxu0 0.0
        %515 = vmatprep.subr.mxu0 0.0
        %516 = vmatpush1.msra.mxu0 0.0
        %517 = vmatprep.subr.mxu0 0.0
        %518 = vmatpush1.msra.mxu0 0.0
        %519 = vmatprep.subr.mxu0 0.0
        %520 = vmatpush1.msra.mxu0 0.0
        %521 = vmatprep.subr.mxu0 0.0
        %522 = vmatpush1.msra.mxu0 0.0
        %523 = vmatprep.subr.mxu0 0.0
        %524 = vmatpush1.msra.mxu0 0.0
        %525 = vmatprep.subr.mxu0 0.0
        %526 = vmatpush1.msra.mxu0 0.0
        %527 = vmatprep.subr.mxu0 0.0
        %528 = vmatpush1.msra.mxu0 0.0
        %529 = vmatprep.subr.mxu0 0.0
        %530 = vmatpush1.msra.mxu0 0.0
        %531 = vmatprep.subr.mxu0 0.0
        %532 = vmatpush1.msra.mxu0 0.0
        %533 = vmatprep.subr.mxu0 0.0
        %534 = vmatpush1.msra.mxu0 0.0
        %535 = vmatprep.subr.mxu0 0.0
        %536 = vmatpush1.msra.mxu0 0.0
        %537 = vmatprep.subr.mxu0 0.0
        %538 = vmatpush1.msra.mxu0 0.0
        %539 = vmatprep.subr.mxu0 0.0
        %540 = vmatpush1.msra.mxu0 0.0
        %541 = vmatprep.subr.mxu0 0.0
        %542 = vmatpush1.msra.mxu0 0.0
        %543 = vmatprep.subr.mxu0 0.0
        %544 = vmatpush1.msra.mxu0 0.0
        %545 = vmatprep.mubr.f32.mxu0 0.0
        %546 = vmatmul.mubr.f32.gmra.mrb[0].mxu0 1.0
        %v547 = vpop.f32.mrb[0].mxu0
        %v548 = vadd.f32 0.0, %v547
        %v549 = vpop.f32.mrb[0].mxu0
        %550 = vdwg.mxu0
        %v551 = vld [vmem:[#allocation4] sm:$0x1]
        %v552 = vadd.f32 %v551, %v462
        %553 = vst [vmem:[#allocation4] sm:$0x1] %v552
        %v554 = vld [vmem:[#allocation4 + $0x1] sm:$0x1]
        %v555 = vadd.f32 %v554, %v548
        %556 = vst [vmem:[#allocation4 + $0x1] sm:$0x1] %v555
        %s557 = sand.u32 %s74, 1
        %s558 = scalar_lea.sflag [#allocation3], %s557
        %s559 = sand.u32 %s74, 1
        %s560 = smul.addr %s559, 128
        %s561 = scalar_lea.vmem [#allocation2], %s560
        // Predicated region
        $region33: #{tpu_custom_call.1} parent=27 // pred_check
          %p562 = pneg %p84
        $region34: #{tpu_custom_call.1} parent=27 // pred_check_branch
          %564 = sbr.rel (%p562) target = $region36
        $region35: #{tpu_custom_call.1} parent=27 // pred_region
          %s565 = smul.u32 16, %s19
          %s567 = ssub.s32 2048, 2048
          %568 = vsyncadd %s558, %s567
          %s569 = smul.addr %s565, 128
          %s570 = scalar_lea.hbm %s2, %s569
          %s571 = sshll.u32 %s561, 4
          %s572 = int_to_ptr.vmem [resolvable:$true] %s571
          %577 = dma.vmem_to_hbm [thread:$0]  %s572, 2048, %s570, %s558, 128, 128, 8
        $region36: #{tpu_custom_call.1} parent=27 // pred_fallthru
          _
        // Predicated region
        $region37: #{tpu_custom_call.1} parent=27 // pred_check
          %p578 = pneg %p105
        $region38: #{tpu_custom_call.1} parent=27 // pred_check_branch
          %580 = sbr.rel (%p578) target = $region40
        $region39: #{tpu_custom_call.1} parent=27 // pred_region
          %s582 = ssub.s32 128, 128
          %583 = vsyncadd [#allocation5], %s582
          %s585 = sshll.u32 [#allocation4], 4
          %s586 = int_to_ptr.vmem [resolvable:$true] %s585
          %588 = dma.vmem_to_hbm [thread:$0]  %s586, 128, %s3, [#allocation5]
        $region40: #{tpu_custom_call.1} parent=27 // pred_fallthru
          _
        // Predicated region
        $region41: #{tpu_custom_call.1} parent=27 // pred_check
          %p589 = pneg %p105
        $region42: #{tpu_custom_call.1} parent=27 // pred_check_branch
          %591 = sbr.rel (%p589) target = $region44
        $region43: #{tpu_custom_call.1} parent=27 // pred_region
          %592 = dma.done [#allocation5], 128
        $region44: #{tpu_custom_call.1} parent=27 // pred_fallthru
          _
      $region28: #{tpu_custom_call.1} parent=5 // pred_fallthru
        _
      %p593 = scmp.le.s32.totalorder 2, %s14
      // Predicated region
      $region45: #{tpu_custom_call.1} parent=5 // pred_check
        %p594 = pneg %p593
      $region46: #{tpu_custom_call.1} parent=5 // pred_check_branch
        %596 = sbr.rel (%p594) target = $region48
      $region47: #{tpu_custom_call.1} parent=5 // pred_region
        %s597 = ssub.s32 %s14, 2
        // Predicated region
        $region49: #{tpu_custom_call.1} parent=47 // pred_check
          %p598 = pneg %p90
        $region50: #{tpu_custom_call.1} parent=47 // pred_check_branch
          %600 = sbr.rel (%p598) target = $region52
        $region51: #{tpu_custom_call.1} parent=47 // pred_region
          %s601 = sand.u32 %s75, 1
          %s602 = scalar_lea.sflag [#allocation3], %s601
          %s603 = sand.u32 %s75, 1
          %s604 = smul.addr %s603, 128
          %s605 = scalar_lea.vmem [#allocation2], %s604
          %606 = dma.done %s602, 2048
        $region52: #{tpu_custom_call.1} parent=47 // pred_fallthru
          _
      $region48: #{tpu_custom_call.1} parent=5 // pred_fallthru
        _
    $region6: #{tpu_custom_call.1} parent=1 // loop_footer
      %s18 = sadd.s32 1, %s14
    $region7: #{tpu_custom_call.1} parent=1 // loop_footer_branch
      %13 = sbr.rel target = $region3
    $region8: #{tpu_custom_call.1} parent=1 // loop_exit
      _
    %607 = vsyncpa [#allocation3], 1
    %s608 = scalar_lea.sflag [#allocation3], 1
    %609 = vsyncpa %s608, 1
    %610 = vsyncpa [#allocation5], 1

</llo_original>
